<compile_context>
chip_gen: v6e
topology: v6e:2x2x1
jax: 0.10.0
libtpu: 0.0.40
codegen_flags: <defaults>
</compile_context>

<pallas_src>
import math
from functools import partial

import jax
import jax.numpy as jnp
from jax.experimental import pallas as pl
from jax.experimental.pallas import tpu as pltpu


# ----------------------------------------------------------------------------
# sin/cos position embedding (faithful port of build_rotary_pos_embed)
# ----------------------------------------------------------------------------
def build_rotary_pos_embed(dim, temperature, grid_size, grid_indexing,
                           grid_offset, pt_grid_size=None):
    assert dim % 4 == 0
    num_bands = dim // 4
    exp = jnp.arange(0, num_bands, 1, dtype=jnp.float32) / num_bands
    bands = 1.0 / (temperature ** exp)                       # (num_bands,)

    if pt_grid_size is None:
        pt_grid_size = grid_size
    t = [
        (jnp.arange(s, dtype=jnp.float32) + grid_offset) / s * p
        for s, p in zip(grid_size, pt_grid_size)
    ]
    grid = jnp.stack(jnp.meshgrid(*t, indexing=grid_indexing), axis=-1)  # (H, W, 2)
    grid = grid[..., None]                                   # (H, W, 2, 1)
    pos = grid * bands                                       # (H, W, 2, num_bands)
    sin_emb = jnp.sin(pos)
    cos_emb = jnp.cos(pos)

    num_spatial_dim = grid_size[0] * grid_size[1]
    # repeat_interleave(2, -1), exactly as the PyTorch module does.
    sin_emb = jnp.repeat(sin_emb.reshape(num_spatial_dim, -1), 2, axis=-1)  # (N, dim)
    cos_emb = jnp.repeat(cos_emb.reshape(num_spatial_dim, -1), 2, axis=-1)  # (N, dim)
    return sin_emb, cos_emb


# ----------------------------------------------------------------------------
# Pallas kernel: out = x * cos + rotate_half(x) * sin, on the lane-dense
# (rows, N*D) layout.  The half-swap of rotate_half becomes two lane rolls of the
# flattened axis; sign and half-selection live in the packed coefficient table:
#   tab[0] = cos
#   tab[1] = sin on the second half of each head_dim block, 0 elsewhere
#            (pairs with roll(+d/2): x[k - d/2])
#   tab[2] = -sin on the first half of each head_dim block, 0 elsewhere
#            (pairs with roll(tl - d/2): x[k + d/2])
# Positions where a roll wraps across a block boundary carry a zero coefficient,
# so the wrap never leaks (requires tl % head_dim == 0, asserted in the wrapper).
# ----------------------------------------------------------------------------
def _rope_kernel(x_ref, tab_ref, o_ref, *, half):
    x = x_ref[...].astype(jnp.float32)            # (TB, TL), lane-dense
    tl = x.shape[-1]
    cos = tab_ref[0:1, :]                         # (1, TL) -> sublane-broadcast
    sin_hi = tab_ref[1:2, :]
    sin_lo = tab_ref[2:3, :]
    r_fwd = pltpu.roll(x, shift=half, axis=1)      # x[k - half]  (np.roll convention)
    r_bwd = pltpu.roll(x, shift=tl - half, axis=1)  # x[k + half]
    out = x * cos + r_fwd * sin_hi + r_bwd * sin_lo
    o_ref[...] = out.astype(o_ref.dtype)


# ----------------------------------------------------------------------------
# Hardware / tile selection helpers
# ----------------------------------------------------------------------------
def _tpu_hw():
    """(vmem_capacity_bytes, multi_tensorcore) with conservative fallbacks."""
    vmem_cap = 128 << 20
    try:
        vmem_cap = int(pltpu.get_tpu_info().vmem_capacity_bytes)
    except Exception:
        pass
    # v7x-like parts have 64 MiB VMEM per TensorCore and 2 TCs per chip.
    multi_tc = vmem_cap <= (64 << 20)
    return vmem_cap, multi_tc


def _valid_col_tiles(cols, d):
    """Ascending column tiles: divide cols, multiple of head_dim (roll stays inside a
    block) and lane-complete (multiple of 128) unless full extent."""
    tiles = [t for t in range(d, cols + 1, d)
             if cols % t == 0 and (t % 128 == 0 or t == cols)]
    return tiles or [cols]


def _largest_row_tile(rows, max_rows):
    """Largest row tile: multiple of 8 (sublane tile), divides rows, <= max_rows.
    Full extent if rows is small or not sublane-aligned (always legal)."""
    if rows <= 8 or rows % 8 != 0:
        return rows
    tb = min(rows, max(8, (int(max_rows) // 8) * 8))
    while rows % tb:
        tb -= 8
    return max(tb, 8)


def _choose_tiles(rows, cols, d, itemsize, *, multi_tc, target_bytes, max_tile_bytes):
    col_tiles = _valid_col_tiles(cols, d)          # ascending
    tl = col_tiles[-1]                             # start at full width

    def row_tile(t_cols):
        return _largest_row_tile(rows, max(8, target_bytes // (t_cols * itemsize)))

    tb = row_tile(tl)
    # If even the thinnest legal row tile blows the per-tile budget, narrow columns.
    idx = len(col_tiles) - 1
    while tb * tl * itemsize > max_tile_bytes and idx > 0:
        idx -= 1
        tl = col_tiles[idx]
        tb = row_tile(tl)
    # Recompute the row tile once the final column width is known, so the actual
    # tile (not the full-row slab) hits the target size.
    tb = row_tile(tl)

    if multi_tc:
        # Feed both TensorCores: make sure some grid axis has >= 2 steps,
        # preferring the (outer) column axis so the tables stay resident per core.
        if cols // tl < 2:
            smaller = [t for t in col_tiles if t < tl]
            if smaller:
                halfish = [t for t in smaller if t <= tl // 2]
                tl = (halfish or smaller)[-1]
                tb = row_tile(tl)
        if cols // tl < 2 and rows // tb < 2 and rows > 8 and rows % 8 == 0:
            tb = _largest_row_tile(rows, rows // 2)
    return tb, tl


# ----------------------------------------------------------------------------
# Wrapper
# ----------------------------------------------------------------------------
def rope_apply(x, tables, head_dim):
    """x: (..., N, D) contiguous.  tables: (3, N*D) f32 packed [cos, +sin_hi, -sin_lo].

    NOTE: x must be materialized contiguously as (..., N, D); the reshape below is
    then a free relabeling.  If a caller passes a transposed view, XLA would insert
    a full relayout copy that costs more than this entire kernel.
    """
    *lead, n, d = x.shape
    assert d == head_dim
    rows = int(math.prod(lead)) if lead else 1
    cols = n * d
    assert tables.shape == (3, cols)
    x2 = x.reshape(rows, cols)                     # free reshape, lane-dense last dim

    itemsize = jnp.dtype(x.dtype).itemsize
    vmem_cap, multi_tc = _tpu_hw()
    if multi_tc:                                   # 64 MiB VMEM/TC parts (v7x-like)
        target_bytes, max_tile_bytes, cap = (3 << 20), (4 << 20), (40 << 20)
    else:                                          # 128 MiB VMEM parts (v5e / v6e)
        target_bytes, max_tile_bytes, cap = (6 << 20), (8 << 20), (96 << 20)
    cap = min(cap, max(32 << 20, (vmem_cap * 3) // 4))

    tb, tl = _choose_tiles(rows, cols, d, itemsize, multi_tc=multi_tc,
                           target_bytes=target_bytes, max_tile_bytes=max_tile_bytes)
    # The roll-wrap masking is only valid when column blocks align with head_dim.
    assert tl % d == 0 and cols % tl == 0 and rows % tb == 0

    # Columns are the OUTER (slow) grid axis: the packed table's block index depends
    # only on it, so the table stays resident across all inner row steps.
    grid = (cols // tl, rows // tb)

    # Double-buffered x/out tiles + the (sublane-padded) table block + headroom.
    est = 4 * tb * tl * itemsize + 2 * 8 * tl * 4 + (4 << 20)
    vmem_limit = int(min(max(est, 32 << 20), cap))

    sems = []
    if multi_tc:
        if grid[0] >= 2:
            sems.append((pltpu.CORE_PARALLEL, pltpu.ARBITRARY))
        elif grid[1] >= 2:
            sems.append((pltpu.ARBITRARY, pltpu.CORE_PARALLEL))
    sems.append((pltpu.PARALLEL, pltpu.PARALLEL))  # safe default / fallback

    kern = partial(_rope_kernel, half=d // 2)
    out_shape = jax.ShapeDtypeStruct((rows, cols), x.dtype)
    last_err = None
    for sem in sems:
        try:
            out = pl.pallas_call(
                kern,
                out_shape=out_shape,
                grid_spec=pltpu.PrefetchScalarGridSpec(
                    num_scalar_prefetch=0,
                    grid=grid,
                    in_specs=[
                        pl.BlockSpec((tb, tl), lambda j, i: (i, j)),   # x
                        pl.BlockSpec((3, tl), lambda j, i: (0, j)),    # packed tables
                    ],
                    out_specs=pl.BlockSpec((tb, tl), lambda j, i: (i, j)),
                ),
                compiler_params=pltpu.CompilerParams(
                    dimension_semantics=sem,
                    vmem_limit_bytes=vmem_limit,
                ),
            )(x2, tables)
            return out.reshape(x.shape)
        except Exception as e:  # e.g. CORE_PARALLEL unsupported -> fall back
            last_err = e
    raise last_err


# ----------------------------------------------------------------------------
# Module-equivalent wrapper (rope_rot_type='standard')
# ----------------------------------------------------------------------------
class RoPE:
    def __init__(self, dim, temperature, grid_size, grid_indexing="ij",
                 grid_offset=0, pt_grid_size=None, rope_rot_type="standard"):
        if rope_rot_type != "standard":
            # TODO(synk): 'interleaved' rot type not ported; only 'standard' (rotate_half).
            raise ValueError(f"Unsupported rope_rot_type: {rope_rot_type}")
        sin_emb, cos_emb = build_rotary_pos_embed(
            dim, temperature, grid_size, grid_indexing, grid_offset, pt_grid_size)
        self.dim = dim
        # Same buffer the PyTorch module keeps (used by the pure-JAX reference).
        self.pos_embed = jnp.concatenate((sin_emb, cos_emb), axis=-1)   # (N, 2*dim)

        # Fold rotate_half's sign + half-selection into two sin tables and pack
        # [cos, +sin|second-half, -sin|first-half] into ONE (3, N*dim) array so the
        # kernel issues a single table DMA per column block.  Pairing is static on
        # the np.roll convention of pltpu.roll (roll(x, s)[k] == x[k - s]).
        first_half = jnp.arange(dim) < (dim // 2)
        cos_row = cos_emb.reshape(-1)
        sin_hi = jnp.where(first_half, 0.0, sin_emb).reshape(-1)    # pairs with x[k - d/2]
        sin_lo = jnp.where(first_half, -sin_emb, 0.0).reshape(-1)   # pairs with x[k + d/2]
        self.tables = jnp.stack([cos_row, sin_hi, sin_lo], axis=0).astype(jnp.float32)

    def __call__(self, x):
        return rope_apply(x, self.tables, self.dim)


# ----------------------------------------------------------------------------
# Pure-JAX reference (mirrors apply_rotary_pos_embed / rotate_half)
# ----------------------------------------------------------------------------
def _rope_ref(x, pos_embed):
    d = x.shape[-1]
    sin = pos_embed[:, :d]
    cos = pos_embed[:, d:]
    x1 = x[..., : d // 2]
    x2 = x[..., d // 2:]
    rot = jnp.concatenate([-x2, x1], axis=-1)
    return x * cos + rot * sin


if __name__ == "__main__":
    # Small shapes consistent with a ViT head: grid 4x4 -> N=16 tokens,
    # head_dim=32, batch=2, heads=4.
    dim = 32
    grid_size = (4, 4)
    batch, heads = 2, 4
    n_tokens = grid_size[0] * grid_size[1]

    rope = RoPE(dim=dim, temperature=100.0, grid_size=grid_size,
                grid_indexing="ij", grid_offset=0)

    key = jax.random.PRNGKey(0)
    x = jax.random.normal(key, (batch, heads, n_tokens, dim), dtype=jnp.float32)

    out = jax.block_until_ready(rope(x))

    ref = _rope_ref(x, rope.pos_embed)
    assert out.shape == x.shape and out.dtype == x.dtype
    assert jnp.allclose(out, ref, atol=1e-5, rtol=1e-5)

    print("KERNEL_OK")
</pallas_src>

<mosaic_0001>
module attributes {stable_mosaic.version = 11 : i64} {
  func.func @_rope_kernel(%arg0: i32, %arg1: i32, %arg2: memref<8x512xf32, #tpu.memory_space<vmem>>, %arg3: memref<3x512xf32, #tpu.memory_space<vmem>>, %arg4: memref<8x512xf32, #tpu.memory_space<vmem>>) attributes {dimension_semantics = [#tpu.dimension_semantics<parallel>, #tpu.dimension_semantics<parallel>], iteration_bounds = array<i64: 1, 1>, scalar_prefetch = 0 : i64, scratch_operands = 0 : i64, tpu.core_type = #tpu.core_type<tc>, window_params = [{transform_indices = @transform_0, window_bounds = array<i64: 8, 512>}, {transform_indices = @transform_1, window_bounds = array<i64: 3, 512>}, {transform_indices = @transform_2, window_bounds = array<i64: 8, 512>}]} {
    %c0 = arith.constant 0 : index
    %c0_0 = arith.constant 0 : index
    %0 = vector.load %arg2[%c0, %c0_0] : memref<8x512xf32, #tpu.memory_space<vmem>>, vector<8x512xf32>
    %c0_1 = arith.constant 0 : index
    %c0_2 = arith.constant 0 : index
    %1 = vector.load %arg3[%c0_1, %c0_2] : memref<3x512xf32, #tpu.memory_space<vmem>>, vector<1x512xf32>
    %c1 = arith.constant 1 : index
    %c0_3 = arith.constant 0 : index
    %2 = vector.load %arg3[%c1, %c0_3] : memref<3x512xf32, #tpu.memory_space<vmem>>, vector<1x512xf32>
    %c2 = arith.constant 2 : index
    %c0_4 = arith.constant 0 : index
    %3 = vector.load %arg3[%c2, %c0_4] : memref<3x512xf32, #tpu.memory_space<vmem>>, vector<1x512xf32>
    %c16_i32 = arith.constant 16 : i32
    %4 = tpu.dynamic_rotate %0 by %c16_i32 dim 1 : vector<8x512xf32>, i32 -> vector<8x512xf32>
    %c496_i32 = arith.constant 496 : i32
    %5 = tpu.dynamic_rotate %0 by %c496_i32 dim 1 : vector<8x512xf32>, i32 -> vector<8x512xf32>
    %6 = vector.broadcast %1 : vector<1x512xf32> to vector<8x512xf32>
    %7 = arith.mulf %0, %6 : vector<8x512xf32>
    %8 = vector.broadcast %2 : vector<1x512xf32> to vector<8x512xf32>
    %9 = arith.mulf %4, %8 : vector<8x512xf32>
    %10 = arith.addf %7, %9 : vector<8x512xf32>
    %11 = vector.broadcast %3 : vector<1x512xf32> to vector<8x512xf32>
    %12 = arith.mulf %5, %11 : vector<8x512xf32>
    %13 = arith.addf %10, %12 : vector<8x512xf32>
    %c0_5 = arith.constant 0 : index
    %c0_6 = arith.constant 0 : index
    %14 = vector.load %arg4[%c0_5, %c0_6] : memref<8x512xf32, #tpu.memory_space<vmem>>, vector<8x512xf32>
    tpu.vector_store %arg4[%c0_5, %c0_6], %13 {strides = array<i32>} : memref<8x512xf32, #tpu.memory_space<vmem>>, vector<8x512xf32>,
    return
  }
  func.func @transform_0(%arg0: i32, %arg1: i32) -> (i32, i32) {
    %c0_i32 = arith.constant 0 : i32
    return %arg1, %arg0 : i32, i32
  }
  func.func @transform_1(%arg0: i32, %arg1: i32) -> (i32, i32) {
    %c0_i32 = arith.constant 0 : i32
    %c0_i32_0 = arith.constant 0 : i32
    return %c0_i32, %arg0 : i32, i32
  }
  func.func @transform_2(%arg0: i32, %arg1: i32) -> (i32, i32) {
    %c0_i32 = arith.constant 0 : i32
    return %arg1, %arg0 : i32, i32
  }
}

</mosaic_0001>

<llo_original>
// kernel: tpu_custom_call.1
$region0: #{tpu_custom_call.1}
  #allocation0 [shape = 'u32[]', space=smem, size = 0x4, offset = 0x4, fixed_abs, tag = 'smem constant byte address 0x4 - core index']
  #allocation1 [shape = 'u32[144,128]{1,0:T(1,128)}', space=vmem, size = 0x12000, scoped, tag = 'internal scratch']
  %s0 = inlined_call_operand.hbm [shape: f32[8,512], index: 0, kind: input, shape index: {}]
  %s1 = inlined_call_operand.hbm [shape: f32[3,512], index: 1, kind: input, shape index: {}]
  %s2 = inlined_call_operand.hbm [shape: f32[8,512], index: 2, kind: output, shape index: {}]
  %s3 = sld [smem:[#allocation0]]
  $region26: #{tpu_custom_call.1} parent=0
    _
  %s5 = ssub.s32 1, %s3
  %s6 = scalar_select 0, %s5, %s3
  $region1: #{tpu_custom_call.1} parent=0
    #allocation2 [shape = 'u8[16384]{0}', space=vmem, size = 0x4000, scoped, tag = 'input window, operand 0, single buffered']
    #allocation3 [shape = 's32[1]{0}', space=sflag, size = 0x4, scoped, tag = 'scoped memory for tpu_custom_call.1']
    #allocation4 [shape = 's32[1]{0}', space=sflag, size = 0x4, scoped, tag = 'scoped memory for tpu_custom_call.1']
    #allocation5 [shape = 'u8[8192]{0}', space=vmem, size = 0x2000, scoped, tag = 'input window, operand 1, single buffered']
    #allocation6 [shape = 's32[1]{0}', space=sflag, size = 0x4, scoped, tag = 'scoped memory for tpu_custom_call.1']
    #allocation7 [shape = 'u8[16384]{0}', space=vmem, size = 0x4000, scoped, tag = 'output window, operand 0, single buffered']
    %7 = vsyncpa [#allocation3], 0
    %8 = vsyncpa [#allocation6], 0
    %9 = vsyncpa [#allocation4], 0
    // Predicated region
    $region2: #{tpu_custom_call.1} parent=1 // pred_check
      _
    $region3: #{tpu_custom_call.1} parent=1 // pred_check_branch
      %11 = sbr.rel (0) target = $region5
    $region4: #{tpu_custom_call.1} parent=1 // pred_region
      %s13 = ssub.s32 512, 512
      %14 = vsyncadd [#allocation3], %s13
      %s16 = sshll.u32 [#allocation2], 4
      %s17 = int_to_ptr.vmem [resolvable:$true] %s16
      %19 = dma.hbm_to_vmem [thread:$0]  %s0, 512, %s17, [#allocation3]
    $region5: #{tpu_custom_call.1} parent=1 // pred_fallthru
      _
    // Predicated region
    $region6: #{tpu_custom_call.1} parent=1 // pred_check
      _
    $region7: #{tpu_custom_call.1} parent=1 // pred_check_branch
      %21 = sbr.rel (0) target = $region9
    $region8: #{tpu_custom_call.1} parent=1 // pred_region
      %s23 = ssub.s32 256, 256
      %24 = vsyncadd [#allocation6], %s23
      %s26 = sshll.u32 [#allocation5], 4
      %s27 = int_to_ptr.vmem [resolvable:$true] %s26
      %29 = dma.hbm_to_vmem [thread:$0]  %s1, 256, %s27, [#allocation6]
    $region9: #{tpu_custom_call.1} parent=1 // pred_fallthru
      _
    // Predicated region
    $region10: #{tpu_custom_call.1} parent=1 // pred_check
      _
    $region11: #{tpu_custom_call.1} parent=1 // pred_check_branch
      %31 = sbr.rel (0) target = $region13
    $region12: #{tpu_custom_call.1} parent=1 // pred_region
      %32 = dma.done [#allocation3], 512
    $region13: #{tpu_custom_call.1} parent=1 // pred_fallthru
      _
    // Predicated region
    $region14: #{tpu_custom_call.1} parent=1 // pred_check
      _
    $region15: #{tpu_custom_call.1} parent=1 // pred_check_branch
      %34 = sbr.rel (0) target = $region17
    $region16: #{tpu_custom_call.1} parent=1 // pred_region
      %35 = dma.done [#allocation6], 256
    $region17: #{tpu_custom_call.1} parent=1 // pred_fallthru
      _
    %v36 = vld [vmem:[#allocation2] sm:$0xff]
    %v37 = vld [vmem:[#allocation2 + $0x8] sm:$0xff]
    %v38 = vld [vmem:[#allocation2 + $0x10] sm:$0xff]
    %v39 = vld [vmem:[#allocation2 + $0x18] sm:$0xff]
    %v40 = vld [vmem:[#allocation5] ss:$4 sm:$0xf]
    %s41 = scalar_lea.vmem [#allocation5], 1
    %v42 = vld [vmem:[%s41] ss:$4 sm:$0xf]
    %s43 = scalar_lea.vmem [#allocation5], 2
    %v44 = vld [vmem:[%s43] ss:$4 sm:$0xf]
    %45 = vrot.lane.b32.xlu0 %v36, 16
    %v46 = vpop.permute.xlu0 %45
    %47 = vrot.lane.b32.xlu0 %v37, 16
    %v48 = vpop.permute.xlu0 %47
    %49 = vrot.lane.b32.xlu0 %v38, 16
    %v50 = vpop.permute.xlu0 %49
    %51 = vrot.lane.b32.xlu0 %v39, 16
    %v52 = vpop.permute.xlu0 %51
    %v53 = vlaneseq
    %v54 = vand.u32 %v53, 127
    %vm55 = vcmp.lt.s32.totalorder %v54, 16
    %v56 = vsel %vm55, %v50, %v52
    %v57 = vsel %vm55, %v48, %v50
    %v58 = vsel %vm55, %v46, %v48
    %v59 = vsel %vm55, %v52, %v46
    %60 = vrot.lane.b32.xlu0 %v36, 112
    %v61 = vpop.permute.xlu0 %60
    %62 = vrot.lane.b32.xlu0 %v37, 112
    %v63 = vpop.permute.xlu0 %62
    %64 = vrot.lane.b32.xlu0 %v38, 112
    %v65 = vpop.permute.xlu0 %64
    %66 = vrot.lane.b32.xlu0 %v39, 112
    %v67 = vpop.permute.xlu0 %66
    %vm68 = vcmp.lt.s32.totalorder %v54, 112
    %v69 = vsel %vm68, %v65, %v67
    %v70 = vsel %vm68, %v63, %v65
    %v71 = vsel %vm68, %v61, %v63
    %v72 = vsel %vm68, %v67, %v61
    %v74 = vlaneseq
    %v75 = vshrl.u32 %v74, 7
    %v76 = vsub.s32 0, %v75
    %v77 = vrot.slane %v40, %v76
    %v78 = vlaneseq
    %v79 = vshrl.u32 %v78, 7
    %v80 = vsub.s32 1, %v79
    %v81 = vrot.slane %v40, %v80
    %v82 = vlaneseq
    %v83 = vshrl.u32 %v82, 7
    %v84 = vsub.s32 2, %v83
    %v85 = vrot.slane %v40, %v84
    %v86 = vlaneseq
    %v87 = vshrl.u32 %v86, 7
    %v88 = vsub.s32 3, %v87
    %v89 = vrot.slane %v40, %v88
    %v94 = vmul.f32 %v36, %v77
    %v95 = vmul.f32 %v37, %v81
    %v96 = vmul.f32 %v38, %v85
    %v97 = vmul.f32 %v39, %v89
    %v99 = vlaneseq
    %v100 = vshrl.u32 %v99, 7
    %v101 = vsub.s32 0, %v100
    %v102 = vrot.slane %v42, %v101
    %v103 = vlaneseq
    %v104 = vshrl.u32 %v103, 7
    %v105 = vsub.s32 1, %v104
    %v106 = vrot.slane %v42, %v105
    %v107 = vlaneseq
    %v108 = vshrl.u32 %v107, 7
    %v109 = vsub.s32 2, %v108
    %v110 = vrot.slane %v42, %v109
    %v111 = vlaneseq
    %v112 = vshrl.u32 %v111, 7
    %v113 = vsub.s32 3, %v112
    %v114 = vrot.slane %v42, %v113
    %v119 = vmul.f32 %v59, %v102
    %v120 = vmul.f32 %v58, %v106
    %v121 = vmul.f32 %v57, %v110
    %v122 = vmul.f32 %v56, %v114
    %v123 = vadd.f32 %v94, %v119
    %v124 = vadd.f32 %v95, %v120
    %v125 = vadd.f32 %v96, %v121
    %v126 = vadd.f32 %v97, %v122
    %v128 = vlaneseq
    %v129 = vshrl.u32 %v128, 7
    %v130 = vsub.s32 0, %v129
    %v131 = vrot.slane %v44, %v130
    %v132 = vlaneseq
    %v133 = vshrl.u32 %v132, 7
    %v134 = vsub.s32 1, %v133
    %v135 = vrot.slane %v44, %v134
    %v136 = vlaneseq
    %v137 = vshrl.u32 %v136, 7
    %v138 = vsub.s32 2, %v137
    %v139 = vrot.slane %v44, %v138
    %v140 = vlaneseq
    %v141 = vshrl.u32 %v140, 7
    %v142 = vsub.s32 3, %v141
    %v143 = vrot.slane %v44, %v142
    %v148 = vmul.f32 %v71, %v131
    %v149 = vmul.f32 %v70, %v135
    %v150 = vmul.f32 %v69, %v139
    %v151 = vmul.f32 %v72, %v143
    %v152 = vadd.f32 %v123, %v148
    %v153 = vadd.f32 %v124, %v149
    %v154 = vadd.f32 %v125, %v150
    %v155 = vadd.f32 %v126, %v151
    %156 = vst [vmem:[#allocation7] sm:$0xff] %v152
    %157 = vst [vmem:[#allocation7 + $0x8] sm:$0xff] %v153
    %158 = vst [vmem:[#allocation7 + $0x10] sm:$0xff] %v154
    %159 = vst [vmem:[#allocation7 + $0x18] sm:$0xff] %v155
    // Predicated region
    $region18: #{tpu_custom_call.1} parent=1 // pred_check
      _
    $region19: #{tpu_custom_call.1} parent=1 // pred_check_branch
      %161 = sbr.rel (0) target = $region21
    $region20: #{tpu_custom_call.1} parent=1 // pred_region
      %s163 = ssub.s32 512, 512
      %164 = vsyncadd [#allocation4], %s163
      %s166 = sshll.u32 [#allocation7], 4
      %s167 = int_to_ptr.vmem [resolvable:$true] %s166
      %169 = dma.vmem_to_hbm [thread:$0]  %s167, 512, %s2, [#allocation4]
    $region21: #{tpu_custom_call.1} parent=1 // pred_fallthru
      _
    // Predicated region
    $region22: #{tpu_custom_call.1} parent=1 // pred_check
      _
    $region23: #{tpu_custom_call.1} parent=1 // pred_check_branch
      %171 = sbr.rel (0) target = $region25
    $region24: #{tpu_custom_call.1} parent=1 // pred_region
      %172 = dma.done [#allocation4], 512
    $region25: #{tpu_custom_call.1} parent=1 // pred_fallthru
      _
    %173 = vsyncpa [#allocation3], 1
    %174 = vsyncpa [#allocation6], 1
    %175 = vsyncpa [#allocation4], 1

</llo_original>
